<compile_context>
chip_gen: v7x
topology: tpu7x:2x2x1
jax: 0.10.0
libtpu: 0.0.40
codegen_flags: <defaults>
</compile_context>

<pallas_src>
import functools
from typing import NamedTuple

import jax
import jax.numpy as jnp
from jax.experimental import pallas as pl
from jax.experimental.pallas import tpu as pltpu


def _round_up(x, m):
    return (x + m - 1) // m * m


def _cdiv(a, b):
    return (a + b - 1) // b


# ---------------------------------------------------------------------------
# Pallas kernel: tiled  relu( relu( (A @ E) @ W1 + b1 ) @ W2 + b2 )
# ---------------------------------------------------------------------------
def gcmc_kernel(a_ref, e_ref, w1_ref, b1_ref, w2_ref, b2_ref, out_ref, acc_ref):
    k = pl.program_id(1)

    @pl.when(k == 0)
    def _():
        acc_ref[...] = jnp.zeros_like(acc_ref)

    # side_embeddings tile: accumulate A[i, k] @ E[k] in f32 (bf16 MXU inputs).
    acc_ref[...] += jnp.dot(a_ref[...], e_ref[...],
                            preferred_element_type=jnp.float32)

    @pl.when(k == pl.num_programs(1) - 1)
    def _():
        # Epilogue only on the last reduction step: bf16 MXU operands, f32 accum.
        side = acc_ref[...].astype(jnp.bfloat16)
        h1 = jnp.dot(side, w1_ref[...], preferred_element_type=jnp.float32)
        h1 = jnp.maximum(h1 + b1_ref[...], 0.0)
        h2 = jnp.dot(h1.astype(jnp.bfloat16), w2_ref[...],
                     preferred_element_type=jnp.float32)
        h2 = jnp.maximum(h2 + b2_ref[...], 0.0)
        out_ref[...] = h2.astype(out_ref.dtype)


def gcmc_propagate(a_p, e_p, w1_p, b1_p, w2_p, b2_p, *, tile_m, tile_k, vmem_limit):
    """a_p: (rows_pad, cols_pad) bf16 adjacency block; e_p: (cols_pad, e_pad) bf16.

    Returns (rows_pad, e_pad) f32 propagated + 2-layer-MLP node embeddings.
    Padded rows hold ReLU(b1)-derived values; callers must slice them off.
    """
    rows_pad, cols_pad = a_p.shape
    e_pad = e_p.shape[1]
    assert rows_pad % tile_m == 0 and cols_pad % tile_k == 0
    assert e_p.shape[0] == cols_pad

    grid = (rows_pad // tile_m, cols_pad // tile_k)
    return pl.pallas_call(
        gcmc_kernel,
        out_shape=jax.ShapeDtypeStruct((rows_pad, e_pad), jnp.float32),
        grid_spec=pltpu.PrefetchScalarGridSpec(
            num_scalar_prefetch=0,
            grid=grid,
            in_specs=[
                pl.BlockSpec((tile_m, tile_k), lambda i, k: (i, k)),   # A block (stream)
                pl.BlockSpec((tile_k, e_pad), lambda i, k: (k, 0)),    # embeddings (stream)
                pl.BlockSpec((e_pad, e_pad), lambda i, k: (0, 0)),     # W1 (resident)
                pl.BlockSpec((1, e_pad), lambda i, k: (0, 0)),         # b1 (resident)
                pl.BlockSpec((e_pad, e_pad), lambda i, k: (0, 0)),     # W2 (resident)
                pl.BlockSpec((1, e_pad), lambda i, k: (0, 0)),         # b2 (resident)
            ],
            out_specs=pl.BlockSpec((tile_m, e_pad), lambda i, k: (i, 0)),
            scratch_shapes=[pltpu.VMEM((tile_m, e_pad), jnp.float32)],
        ),
        compiler_params=pltpu.CompilerParams(
            dimension_semantics=("parallel", "arbitrary"),  # rows parallel, K last
            vmem_limit_bytes=vmem_limit,
        ),
    )(a_p, e_p, w1_p, b1_p, w2_p, b2_p)


# ---------------------------------------------------------------------------
# One-time graph preprocessing (hoisted out of the per-forward jit path)
# ---------------------------------------------------------------------------
class Plan(NamedTuple):
    tile_m: int
    tile_k: int
    rows_pad: int
    cols_pad: int


class GcmcMeta(NamedTuple):
    n_user: int
    n_item: int
    plan_u: Plan
    plan_i: Plan
    vmem_limit: int


def _default_tiling():
    # v7x-safe defaults (64 MiB VMEM): ~20 MiB double-buffered pipeline footprint.
    tile_m, tile_k, vmem_limit = 2048, 2048, 48 << 20
    try:
        cap = getattr(pltpu.get_tpu_info(), "vmem_capacity_bytes", 64 << 20)
        if cap >= (100 << 20):  # v5e / v6e: 128 MiB VMEM -> longer K tiles
            tile_m, tile_k, vmem_limit = 2048, 4096, 100 << 20
    except Exception:
        pass
    return tile_m, tile_k, vmem_limit


def _pick_tile_m(rows, tile_m):
    rows_p = _round_up(rows, 16)  # bf16 A tile: sublane packing pairs rows (x16)
    if rows_p <= tile_m:
        if rows_p >= 1024:
            # Split mid-sized row ranges in two so v7x megacore has >= 2 row tiles.
            return _round_up(_cdiv(rows_p, 2), 16)
        return rows_p
    return tile_m


def _make_plan(rows, cols, tile_m, tile_k):
    tile_m = _round_up(tile_m, 16)
    tile_k = _round_up(tile_k, 128)
    tile_m = _pick_tile_m(rows, tile_m)
    tile_k = min(tile_k, _round_up(cols, 128))
    return Plan(tile_m, tile_k, _round_up(rows, tile_m), _round_up(cols, tile_k))


def _pad_bf16(x, rows_pad, cols_pad):
    r, c = x.shape
    return jnp.zeros((rows_pad, cols_pad), jnp.bfloat16).at[:r, :c].set(
        x.astype(jnp.bfloat16))


def prepare_gcmc_graph(a_hat, n_user, n_item, *, tile_m=None, tile_k=None,
                       vmem_limit=None):
    """Slice the bipartite off-diagonal blocks of norm_adj and pad/cast them to
    bf16 once (the graph is fixed, so this never re-runs per forward call)."""
    dm, dk, dv = _default_tiling()
    tile_m = dm if tile_m is None else tile_m
    tile_k = dk if tile_k is None else tile_k
    vmem_limit = dv if vmem_limit is None else vmem_limit

    r_ui = a_hat[:n_user, n_user:]      # user <- item messages
    r_iu = a_hat[n_user:, :n_user]      # item <- user messages
    plan_u = _make_plan(n_user, n_item, tile_m, tile_k)
    plan_i = _make_plan(n_item, n_user, tile_m, tile_k)
    graph = {
        "r_ui": _pad_bf16(r_ui, plan_u.rows_pad, plan_u.cols_pad),
        "r_iu": _pad_bf16(r_iu, plan_i.rows_pad, plan_i.cols_pad),
    }
    return graph, GcmcMeta(n_user, n_item, plan_u, plan_i, vmem_limit)


# ---------------------------------------------------------------------------
# GCMC forward (equivalent of GCMC.forward(..., drop_flag=False))
# ---------------------------------------------------------------------------
@functools.partial(jax.jit, static_argnames=("meta",))
def gcmc_forward(params, graph, users, pos_items, neg_items, *, meta):
    e = params["user_emb"].shape[1]
    e_pad = _round_up(e, 128)

    def pad_w(w):
        return jnp.zeros((e_pad, e_pad), jnp.bfloat16).at[:e, :e].set(
            w.astype(jnp.bfloat16))

    def pad_b(b):
        return jnp.zeros((1, e_pad), jnp.float32).at[:, :e].set(
            b.astype(jnp.float32))

    def pad_emb(emb, cols_pad):
        n = emb.shape[0]
        return jnp.zeros((cols_pad, e_pad), jnp.bfloat16).at[:n, :e].set(
            emb.astype(jnp.bfloat16))

    w1_p, w2_p = pad_w(params["W1"]), pad_w(params["W2"])
    b1_p, b2_p = pad_b(params["b1"]), pad_b(params["b2"])
    item_p = pad_emb(params["item_emb"], meta.plan_u.cols_pad)  # cheap: O(N*E)
    user_p = pad_emb(params["user_emb"], meta.plan_i.cols_pad)

    # user rows: side = R_ui @ item_emb ; item rows: side = R_iu @ user_emb.
    u_all = gcmc_propagate(graph["r_ui"], item_p, w1_p, b1_p, w2_p, b2_p,
                           tile_m=meta.plan_u.tile_m, tile_k=meta.plan_u.tile_k,
                           vmem_limit=meta.vmem_limit)[:meta.n_user, :e]
    i_all = gcmc_propagate(graph["r_iu"], user_p, w1_p, b1_p, w2_p, b2_p,
                           tile_m=meta.plan_i.tile_m, tile_k=meta.plan_i.tile_k,
                           vmem_limit=meta.vmem_limit)[:meta.n_item, :e]

    return u_all[users, :], i_all[pos_items, :], i_all[neg_items, :]


# ---------------------------------------------------------------------------
# Deterministic parameter / adjacency construction + pure-JAX references
# ---------------------------------------------------------------------------
def xavier_uniform(key, shape, dtype=jnp.float32):
    fan_in, fan_out = shape[0], shape[1]
    bound = jnp.sqrt(6.0 / (fan_in + fan_out))
    return jax.random.uniform(key, shape, dtype, minval=-bound, maxval=bound)


def init_gcmc_params(key, n_user, n_item, emb_size):
    k = jax.random.split(key, 6)
    return {
        "user_emb": xavier_uniform(k[0], (n_user, emb_size)),
        "item_emb": xavier_uniform(k[1], (n_item, emb_size)),
        "W1": xavier_uniform(k[2], (emb_size, emb_size)),
        "b1": xavier_uniform(k[3], (1, emb_size)),
        "W2": xavier_uniform(k[4], (emb_size, emb_size)),
        "b2": xavier_uniform(k[5], (1, emb_size)),
    }


def make_norm_adj(key, n_user, n_item):
    """Deterministic symmetric-normalized bipartite adjacency, dense [N, N]."""
    n = n_user + n_item
    r = (jax.random.uniform(key, (n_user, n_item)) < 0.3).astype(jnp.float32)
    a = jnp.zeros((n, n), jnp.float32)
    a = a.at[:n_user, n_user:].set(r)
    a = a.at[n_user:, :n_user].set(r.T)
    deg = jnp.maximum(a.sum(axis=1), 1.0)
    d_inv_sqrt = 1.0 / jnp.sqrt(deg)
    return a * d_inv_sqrt[:, None] * d_inv_sqrt[None, :]


def _ref_forward(a_hat, params, users, pos_items, neg_items, n_user, *, quantize):
    """quantize=True mirrors the kernel's bf16 quantization points (tight tol);
    quantize=False is the pure-f32 reference (loose tol)."""
    hp = jax.lax.Precision.HIGHEST
    if quantize:
        bf = lambda x: x.astype(jnp.bfloat16).astype(jnp.float32)
    else:
        bf = lambda x: x
    ego = jnp.concatenate([params["user_emb"], params["item_emb"]], axis=0)
    side = jnp.dot(bf(a_hat), bf(ego), precision=hp)
    h1 = jax.nn.relu(jnp.dot(bf(side), bf(params["W1"]), precision=hp) + params["b1"])
    h2 = jax.nn.relu(jnp.dot(bf(h1), bf(params["W2"]), precision=hp) + params["b2"])
    u_g, i_g = h2[:n_user, :], h2[n_user:, :]
    return u_g[users, :], i_g[pos_items, :], i_g[neg_items, :]


def _run_case(key, n_user, n_item, emb_size, batch, **prep_kwargs):
    k_par, k_adj, k_u, k_p, k_n = jax.random.split(key, 5)
    params = init_gcmc_params(k_par, n_user, n_item, emb_size)
    a_hat = make_norm_adj(k_adj, n_user, n_item)
    users = jax.random.randint(k_u, (batch,), 0, n_user)
    pos_items = jax.random.randint(k_p, (batch,), 0, n_item)
    neg_items = jax.random.randint(k_n, (batch,), 0, n_item)

    graph, meta = prepare_gcmc_graph(a_hat, n_user, n_item, **prep_kwargs)
    outs = gcmc_forward(params, graph, users, pos_items, neg_items, meta=meta)
    jax.block_until_ready(outs)
    u_e, pos_e, neg_e = outs

    refs_q = _ref_forward(a_hat, params, users, pos_items, neg_items, n_user,
                          quantize=True)
    refs_f = _ref_forward(a_hat, params, users, pos_items, neg_items, n_user,
                          quantize=False)

    assert u_e.shape == (batch, emb_size)
    for got, ref in zip((u_e, pos_e, neg_e), refs_q):
        assert jnp.allclose(got, ref, atol=2e-3, rtol=2e-3), \
            f"tight-check max err {float(jnp.max(jnp.abs(got - ref)))}"
    # NOTE: bf16 streaming error grows with N; revalidate this loose tol at scale.
    for got, ref in zip((u_e, pos_e, neg_e), refs_f):
        assert jnp.allclose(got, ref, atol=5e-2, rtol=5e-2), \
            f"f32-check max err {float(jnp.max(jnp.abs(got - ref)))}"


if __name__ == "__main__":
    # Case 1: tiny single-tile shapes.
    _run_case(jax.random.PRNGKey(0), n_user=8, n_item=12, emb_size=32, batch=4)
    # Case 2: explicit small tiles force a multi-tile grid (row tiles + K
    # accumulation steps), exercising the pl.when init/finalize path.
    _run_case(jax.random.PRNGKey(1), n_user=96, n_item=160, emb_size=32, batch=4,
              tile_m=64, tile_k=128)
    print("KERNEL_OK")
</pallas_src>

<mosaic_0001>
module attributes {stable_mosaic.version = 11 : i64} {
  func.func @gcmc_kernel(%arg0: i32, %arg1: i32, %arg2: memref<16x128xbf16, #tpu.memory_space<vmem>>, %arg3: memref<128x128xbf16, #tpu.memory_space<vmem>>, %arg4: memref<128x128xbf16, #tpu.memory_space<vmem>>, %arg5: memref<1x128xf32, #tpu.memory_space<vmem>>, %arg6: memref<128x128xbf16, #tpu.memory_space<vmem>>, %arg7: memref<1x128xf32, #tpu.memory_space<vmem>>, %arg8: memref<16x128xf32, #tpu.memory_space<vmem>>, %arg9: memref<16x128xf32, #tpu.memory_space<vmem>>) attributes {dimension_semantics = [#tpu.dimension_semantics<parallel>, #tpu.dimension_semantics<arbitrary>], iteration_bounds = array<i64: 1, 1>, scalar_prefetch = 0 : i64, scratch_operands = 1 : i64, tpu.core_type = #tpu.core_type<tc>, window_params = [{transform_indices = @transform_0, window_bounds = array<i64: 16, 128>}, {transform_indices = @transform_1, window_bounds = array<i64: 128, 128>}, {pipeline_mode = #tpu.pipeline_mode<synchronous>, transform_indices = @transform_2, window_bounds = array<i64: 128, 128>}, {pipeline_mode = #tpu.pipeline_mode<synchronous>, transform_indices = @transform_3, window_bounds = array<i64: 1, 128>}, {pipeline_mode = #tpu.pipeline_mode<synchronous>, transform_indices = @transform_4, window_bounds = array<i64: 128, 128>}, {pipeline_mode = #tpu.pipeline_mode<synchronous>, transform_indices = @transform_5, window_bounds = array<i64: 1, 128>}, {transform_indices = @transform_6, window_bounds = array<i64: 16, 128>}]} {
    %c0_i32 = arith.constant 0 : i32
    %0 = arith.cmpi eq, %arg1, %c0_i32 : i32
    %1 = arith.extui %0 : i1 to i32
    %c0_i32_0 = arith.constant 0 : i32
    %2 = arith.cmpi ne, %1, %c0_i32_0 : i32
    scf.if %2 {
      %cst_10 = arith.constant 0.000000e+00 : f32
      %12 = vector.broadcast %cst_10 : f32 to vector<16x128xf32>
      %c0_11 = arith.constant 0 : index
      %c0_12 = arith.constant 0 : index
      %13 = vector.load %arg9[%c0_11, %c0_12] : memref<16x128xf32, #tpu.memory_space<vmem>>, vector<16x128xf32>
      tpu.vector_store %arg9[%c0_11, %c0_12], %12 {strides = array<i32>} : memref<16x128xf32, #tpu.memory_space<vmem>>, vector<16x128xf32>,
    } else {
    }
    %c0 = arith.constant 0 : index
    %c0_1 = arith.constant 0 : index
    %3 = vector.load %arg9[%c0, %c0_1] : memref<16x128xf32, #tpu.memory_space<vmem>>, vector<16x128xf32>
    %c0_2 = arith.constant 0 : index
    %c0_3 = arith.constant 0 : index
    %4 = vector.load %arg2[%c0_2, %c0_3] : memref<16x128xbf16, #tpu.memory_space<vmem>>, vector<16x128xbf16>
    %c0_4 = arith.constant 0 : index
    %c0_5 = arith.constant 0 : index
    %5 = vector.load %arg3[%c0_4, %c0_5] : memref<128x128xbf16, #tpu.memory_space<vmem>>, vector<128x128xbf16>
    %cst = arith.constant dense<0.000000e+00> : vector<16x128xf32>
    %6 = tpu.matmul %4, %5, %cst {dimension_numbers = #tpu.dot_dimension_numbers<[1], [0], [0], [1], [0, 0, 1, 1], [], []>} : vector<16x128xbf16>, vector<128x128xbf16>, vector<16x128xf32> -> vector<16x128xf32>
    %7 = arith.addf %3, %6 : vector<16x128xf32>
    %c0_6 = arith.constant 0 : index
    %c0_7 = arith.constant 0 : index
    %8 = vector.load %arg9[%c0_6, %c0_7] : memref<16x128xf32, #tpu.memory_space<vmem>>, vector<16x128xf32>
    tpu.vector_store %arg9[%c0_6, %c0_7], %7 {strides = array<i32>} : memref<16x128xf32, #tpu.memory_space<vmem>>, vector<16x128xf32>,
    %c0_i32_8 = arith.constant 0 : i32
    %9 = arith.cmpi eq, %arg1, %c0_i32_8 : i32
    %10 = arith.extui %9 : i1 to i32
    %c0_i32_9 = arith.constant 0 : i32
    %11 = arith.cmpi ne, %10, %c0_i32_9 : i32
    scf.if %11 {
      %c0_10 = arith.constant 0 : index
      %c0_11 = arith.constant 0 : index
      %12 = vector.load %arg9[%c0_10, %c0_11] : memref<16x128xf32, #tpu.memory_space<vmem>>, vector<16x128xf32>
      %13 = arith.truncf %12 : vector<16x128xf32> to vector<16x128xbf16>
      %c0_12 = arith.constant 0 : index
      %c0_13 = arith.constant 0 : index
      %14 = vector.load %arg4[%c0_12, %c0_13] : memref<128x128xbf16, #tpu.memory_space<vmem>>, vector<128x128xbf16>
      %cst_14 = arith.constant dense<0.000000e+00> : vector<16x128xf32>
      %15 = tpu.matmul %13, %14, %cst_14 {dimension_numbers = #tpu.dot_dimension_numbers<[1], [0], [0], [1], [0, 0, 1, 1], [], []>} : vector<16x128xbf16>, vector<128x128xbf16>, vector<16x128xf32> -> vector<16x128xf32>
      %c0_15 = arith.constant 0 : index
      %c0_16 = arith.constant 0 : index
      %16 = vector.load %arg5[%c0_15, %c0_16] : memref<1x128xf32, #tpu.memory_space<vmem>>, vector<1x128xf32>
      %17 = vector.broadcast %16 : vector<1x128xf32> to vector<16x128xf32>
      %18 = arith.addf %15, %17 : vector<16x128xf32>
      %cst_17 = arith.constant 0.000000e+00 : f32
      %19 = vector.broadcast %cst_17 : f32 to vector<16x128xf32>
      %20 = arith.maximumf %18, %19 : vector<16x128xf32>
      %21 = arith.truncf %20 : vector<16x128xf32> to vector<16x128xbf16>
      %c0_18 = arith.constant 0 : index
      %c0_19 = arith.constant 0 : index
      %22 = vector.load %arg6[%c0_18, %c0_19] : memref<128x128xbf16, #tpu.memory_space<vmem>>, vector<128x128xbf16>
      %cst_20 = arith.constant dense<0.000000e+00> : vector<16x128xf32>
      %23 = tpu.matmul %21, %22, %cst_20 {dimension_numbers = #tpu.dot_dimension_numbers<[1], [0], [0], [1], [0, 0, 1, 1], [], []>} : vector<16x128xbf16>, vector<128x128xbf16>, vector<16x128xf32> -> vector<16x128xf32>
      %c0_21 = arith.constant 0 : index
      %c0_22 = arith.constant 0 : index
      %24 = vector.load %arg7[%c0_21, %c0_22] : memref<1x128xf32, #tpu.memory_space<vmem>>, vector<1x128xf32>
      %25 = vector.broadcast %24 : vector<1x128xf32> to vector<16x128xf32>
      %26 = arith.addf %23, %25 : vector<16x128xf32>
      %cst_23 = arith.constant 0.000000e+00 : f32
      %27 = vector.broadcast %cst_23 : f32 to vector<16x128xf32>
      %28 = arith.maximumf %26, %27 : vector<16x128xf32>
      %c0_24 = arith.constant 0 : index
      %c0_25 = arith.constant 0 : index
      %29 = vector.load %arg8[%c0_24, %c0_25] : memref<16x128xf32, #tpu.memory_space<vmem>>, vector<16x128xf32>
      tpu.vector_store %arg8[%c0_24, %c0_25], %28 {strides = array<i32>} : memref<16x128xf32, #tpu.memory_space<vmem>>, vector<16x128xf32>,
    } else {
    }
    return
  }
  func.func @transform_0(%arg0: i32, %arg1: i32) -> (i32, i32) {
    %c0_i32 = arith.constant 0 : i32
    return %arg0, %arg1 : i32, i32
  }
  func.func @transform_1(%arg0: i32, %arg1: i32) -> (i32, i32) {
    %c0_i32 = arith.constant 0 : i32
    %c0_i32_0 = arith.constant 0 : i32
    return %arg1, %c0_i32 : i32, i32
  }
  func.func @transform_2(%arg0: i32, %arg1: i32) -> (i32, i32) {
    %c0_i32 = arith.constant 0 : i32
    %c0_i32_0 = arith.constant 0 : i32
    %c0_i32_1 = arith.constant 0 : i32
    return %c0_i32, %c0_i32_0 : i32, i32
  }
  func.func @transform_3(%arg0: i32, %arg1: i32) -> (i32, i32) {
    %c0_i32 = arith.constant 0 : i32
    %c0_i32_0 = arith.constant 0 : i32
    %c0_i32_1 = arith.constant 0 : i32
    return %c0_i32, %c0_i32_0 : i32, i32
  }
  func.func @transform_4(%arg0: i32, %arg1: i32) -> (i32, i32) {
    %c0_i32 = arith.constant 0 : i32
    %c0_i32_0 = arith.constant 0 : i32
    %c0_i32_1 = arith.constant 0 : i32
    return %c0_i32, %c0_i32_0 : i32, i32
  }
  func.func @transform_5(%arg0: i32, %arg1: i32) -> (i32, i32) {
    %c0_i32 = arith.constant 0 : i32
    %c0_i32_0 = arith.constant 0 : i32
    %c0_i32_1 = arith.constant 0 : i32
    return %c0_i32, %c0_i32_0 : i32, i32
  }
  func.func @transform_6(%arg0: i32, %arg1: i32) -> (i32, i32) {
    %c0_i32 = arith.constant 0 : i32
    %c0_i32_0 = arith.constant 0 : i32
    return %arg0, %c0_i32 : i32, i32
  }
}

</mosaic_0001>

<llo_original>
// kernel: gcmc_forward.2
$region0: #{gcmc_forward.2}
  #allocation0 [shape = 'u32[]', space=smem, size = 0x4, offset = 0x4, fixed_abs, tag = 'smem constant byte address 0x4 - core index']
  #allocation1 [shape = 'u32[144,128]{1,0:T(1,128)}', space=vmem, size = 0x12000, scoped, tag = 'internal scratch']
  #allocation2 [shape = 'f32[16,128]{1,0:T(8,128)}', space=vmem, size = 0x2000, scoped, tag = 'scratch operand']
  %s0 = inlined_call_operand.vmem [shape: bf16[16,128], index: 0, kind: input, shape index: {}]
  %s1 = inlined_call_operand.vmem [shape: bf16[128,128], index: 1, kind: input, shape index: {}]
  %s2 = inlined_call_operand.vmem [shape: bf16[128,128], index: 2, kind: input, shape index: {}]
  %s3 = inlined_call_operand.vmem [shape: f32[1,128], index: 3, kind: input, shape index: {}]
  %s4 = inlined_call_operand.vmem [shape: bf16[128,128], index: 4, kind: input, shape index: {}]
  %s5 = inlined_call_operand.vmem [shape: f32[1,128], index: 5, kind: input, shape index: {}]
  %s6 = inlined_call_operand.vmem [shape: f32[16,128], index: 6, kind: output, shape index: {}]
  %s7 = sld [smem:[#allocation0]]
  $region42: #{gcmc_forward.2} parent=0
    _
  %s9 = ssub.s32 1, %s7
  %s10 = scalar_select 0, %s9, %s7
  // Predicated region
  $region2: #{gcmc_forward.2} parent=0 // pred_check
    _
  $region3: #{gcmc_forward.2} parent=0 // pred_check_branch
    %12 = sbr.rel (0) target = $region5
  $region4: #{gcmc_forward.2} parent=0 // pred_region
    _
  $region5: #{gcmc_forward.2} parent=0 // pred_fallthru
    _
  // Predicated region
  $region6: #{gcmc_forward.2} parent=0 // pred_check
    _
  $region7: #{gcmc_forward.2} parent=0 // pred_check_branch
    %14 = sbr.rel (0) target = $region9
  $region8: #{gcmc_forward.2} parent=0 // pred_region
    _
  $region9: #{gcmc_forward.2} parent=0 // pred_fallthru
    _
  // Predicated region
  $region10: #{gcmc_forward.2} parent=0 // pred_check
    _
  $region11: #{gcmc_forward.2} parent=0 // pred_check_branch
    %16 = sbr.rel (0) target = $region13
  $region12: #{gcmc_forward.2} parent=0 // pred_region
    _
  $region13: #{gcmc_forward.2} parent=0 // pred_fallthru
    _
  // Predicated region
  $region14: #{gcmc_forward.2} parent=0 // pred_check
    _
  $region15: #{gcmc_forward.2} parent=0 // pred_check_branch
    %18 = sbr.rel (0) target = $region17
  $region16: #{gcmc_forward.2} parent=0 // pred_region
    _
  $region17: #{gcmc_forward.2} parent=0 // pred_fallthru
    _
  // Predicated region
  $region18: #{gcmc_forward.2} parent=0 // pred_check
    _
  $region19: #{gcmc_forward.2} parent=0 // pred_check_branch
    %20 = sbr.rel (0) target = $region21
  $region20: #{gcmc_forward.2} parent=0 // pred_region
    _
  $region21: #{gcmc_forward.2} parent=0 // pred_fallthru
    _
  // Predicated region
  $region22: #{gcmc_forward.2} parent=0 // pred_check
    _
  $region23: #{gcmc_forward.2} parent=0 // pred_check_branch
    %22 = sbr.rel (0) target = $region25
  $region24: #{gcmc_forward.2} parent=0 // pred_region
    _
  $region25: #{gcmc_forward.2} parent=0 // pred_fallthru
    _
  %p24 = scmp.eq.s32.totalorder 0, 0
  // Predicated region
  $region26: #{gcmc_forward.2} parent=0 // pred_check
    %p25 = pneg %p24
  $region27: #{gcmc_forward.2} parent=0 // pred_check_branch
    %27 = sbr.rel (%p25) target = $region29
  $region28: #{gcmc_forward.2} parent=0 // pred_region
    %28 = vst [vmem:[#allocation2] sm:$0xff] 0.0
    %29 = vst [vmem:[#allocation2 + $0x8] sm:$0xff] 0.0
  $region29: #{gcmc_forward.2} parent=0 // pred_fallthru
    _
  %v30 = vld [vmem:[#allocation2] sm:$0xff]
  %v31 = vld [vmem:[#allocation2 + $0x8] sm:$0xff]
  %v32 = vld [vmem:[%s0] sm:$0xf]
  %v33 = vld [vmem:[%s0 + $0x4] sm:$0xf]
  %v34 = vld [vmem:[%s1] sm:$0xf]
  %v35 = vld [vmem:[%s1 + $0x4] sm:$0xf]
  %v36 = vld [vmem:[%s1 + $0x8] sm:$0xf]
  %v37 = vld [vmem:[%s1 + $0xc] sm:$0xf]
  %v38 = vld [vmem:[%s1 + $0x10] sm:$0xf]
  %v39 = vld [vmem:[%s1 + $0x14] sm:$0xf]
  %v40 = vld [vmem:[%s1 + $0x18] sm:$0xf]
  %v41 = vld [vmem:[%s1 + $0x1c] sm:$0xf]
  %v42 = vld [vmem:[%s1 + $0x20] sm:$0xf]
  %v43 = vld [vmem:[%s1 + $0x24] sm:$0xf]
  %v44 = vld [vmem:[%s1 + $0x28] sm:$0xf]
  %v45 = vld [vmem:[%s1 + $0x2c] sm:$0xf]
  %v46 = vld [vmem:[%s1 + $0x30] sm:$0xf]
  %v47 = vld [vmem:[%s1 + $0x34] sm:$0xf]
  %v48 = vld [vmem:[%s1 + $0x38] sm:$0xf]
  %v49 = vld [vmem:[%s1 + $0x3c] sm:$0xf]
  %v52 = vunpack.c.l.b16 %v32
  %v53 = vunpack.c.l.b16 %v33
  %v54 = vpack.c.b16 %v53, %v52
  %v72 = vunpack.c.l.b16 %v34
  %v73 = vunpack.c.l.b16 %v35
  %v74 = vunpack.c.l.b16 %v36
  %v75 = vunpack.c.l.b16 %v37
  %v76 = vunpack.c.l.b16 %v38
  %v77 = vunpack.c.l.b16 %v39
  %v78 = vunpack.c.l.b16 %v40
  %v79 = vunpack.c.l.b16 %v41
  %v80 = vunpack.c.l.b16 %v42
  %v81 = vunpack.c.l.b16 %v43
  %v82 = vunpack.c.l.b16 %v44
  %v83 = vunpack.c.l.b16 %v45
  %v84 = vunpack.c.l.b16 %v46
  %v85 = vunpack.c.l.b16 %v47
  %v86 = vunpack.c.l.b16 %v48
  %v87 = vunpack.c.l.b16 %v49
  %v88 = vpack.c.b16 %v73, %v72
  %v89 = vpack.c.b16 %v75, %v74
  %v90 = vpack.c.b16 %v77, %v76
  %v91 = vpack.c.b16 %v79, %v78
  %v92 = vpack.c.b16 %v81, %v80
  %v93 = vpack.c.b16 %v83, %v82
  %v94 = vpack.c.b16 %v85, %v84
  %v95 = vpack.c.b16 %v87, %v86
  %104 = vmatprep.subr.bf16.mxu0 0
  %105 = vmatpush1.bf16.msra.mxu0 %v88
  %106 = vmatprep.subr.bf16.mxu0 0
  %107 = vmatpush1.bf16.msra.mxu0 %v89
  %108 = vmatprep.subr.bf16.mxu0 0
  %109 = vmatpush1.bf16.msra.mxu0 %v90
  %110 = vmatprep.subr.bf16.mxu0 0
  %111 = vmatpush1.bf16.msra.mxu0 %v91
  %112 = vmatprep.subr.bf16.mxu0 0
  %113 = vmatpush1.bf16.msra.mxu0 %v92
  %114 = vmatprep.subr.bf16.mxu0 0
  %115 = vmatpush1.bf16.msra.mxu0 %v93
  %116 = vmatprep.subr.bf16.mxu0 0
  %117 = vmatpush1.bf16.msra.mxu0 %v94
  %118 = vmatprep.subr.bf16.mxu0 0
  %119 = vmatpush1.bf16.msra.mxu0 %v95
  %120 = vmatprep.subr.bf16.mxu0 0
  %121 = vmatpush1.bf16.msra.mxu0 0
  %122 = vmatprep.subr.bf16.mxu0 0
  %123 = vmatpush1.bf16.msra.mxu0 0
  %124 = vmatprep.subr.bf16.mxu0 0
  %125 = vmatpush1.bf16.msra.mxu0 0
  %126 = vmatprep.subr.bf16.mxu0 0
  %127 = vmatpush1.bf16.msra.mxu0 0
  %128 = vmatprep.subr.bf16.mxu0 0
  %129 = vmatpush1.bf16.msra.mxu0 0
  %130 = vmatprep.subr.bf16.mxu0 0
  %131 = vmatpush1.bf16.msra.mxu0 0
  %132 = vmatprep.subr.bf16.mxu0 0
  %133 = vmatpush1.bf16.msra.mxu0 0
  %134 = vmatprep.subr.bf16.mxu0 0
  %135 = vmatpush1.bf16.msra.mxu0 0
  %136 = vmatprep.mubr.bf16.mxu0 0
  %137 = vmatmul.mubr.bf16.gmra.mrb[0].mxu0 %v54
  %v138 = vpop.f32.mrb[0].mxu0
  %v139 = vadd.f32 0.0, %v138
  %v140 = vpop.f32.mrb[0].mxu0
  %v141 = vpop.f32.mrb[0].mxu0
  %v142 = vadd.f32 0.0, %v141
  %v143 = vpop.f32.mrb[0].mxu0
  %144 = vdwg.mxu0
  %v145 = vadd.f32 %v30, %v139
  %v146 = vadd.f32 %v31, %v142
  %147 = vst [vmem:[#allocation2] sm:$0xff] %v145
  %148 = vst [vmem:[#allocation2 + $0x8] sm:$0xff] %v146
  // Predicated region
  $region30: #{gcmc_forward.2} parent=0 // pred_check
    %p149 = pneg %p24
  $region31: #{gcmc_forward.2} parent=0 // pred_check_branch
    %151 = sbr.rel (%p149) target = $region33
  $region32: #{gcmc_forward.2} parent=0 // pred_region
    %v152 = vld [vmem:[#allocation2] sm:$0xff]
    %v153 = vld [vmem:[#allocation2 + $0x8] sm:$0xff]
    %v154 = vpack.c.bf16 %v153, %v152
    %v155 = vld [vmem:[%s2] sm:$0xf]
    %v156 = vld [vmem:[%s2 + $0x4] sm:$0xf]
    %v157 = vld [vmem:[%s2 + $0x8] sm:$0xf]
    %v158 = vld [vmem:[%s2 + $0xc] sm:$0xf]
    %v159 = vld [vmem:[%s2 + $0x10] sm:$0xf]
    %v160 = vld [vmem:[%s2 + $0x14] sm:$0xf]
    %v161 = vld [vmem:[%s2 + $0x18] sm:$0xf]
    %v162 = vld [vmem:[%s2 + $0x1c] sm:$0xf]
    %v163 = vld [vmem:[%s2 + $0x20] sm:$0xf]
    %v164 = vld [vmem:[%s2 + $0x24] sm:$0xf]
    %v165 = vld [vmem:[%s2 + $0x28] sm:$0xf]
    %v166 = vld [vmem:[%s2 + $0x2c] sm:$0xf]
    %v167 = vld [vmem:[%s2 + $0x30] sm:$0xf]
    %v168 = vld [vmem:[%s2 + $0x34] sm:$0xf]
    %v169 = vld [vmem:[%s2 + $0x38] sm:$0xf]
    %v170 = vld [vmem:[%s2 + $0x3c] sm:$0xf]
    %v171 = vld [vmem:[%s3] sm:$0x1]
    %v173 = vlaneseq
    %v174 = vshrl.u32 %v173, 7
    %v175 = vsub.s32 0, %v174
    %v176 = vrot.slane %v171, %v175
    %v194 = vunpack.c.l.b16 %v155
    %v195 = vunpack.c.l.b16 %v156
    %v196 = vunpack.c.l.b16 %v157
    %v197 = vunpack.c.l.b16 %v158
    %v198 = vunpack.c.l.b16 %v159
    %v199 = vunpack.c.l.b16 %v160
    %v200 = vunpack.c.l.b16 %v161
    %v201 = vunpack.c.l.b16 %v162
    %v202 = vunpack.c.l.b16 %v163
    %v203 = vunpack.c.l.b16 %v164
    %v204 = vunpack.c.l.b16 %v165
    %v205 = vunpack.c.l.b16 %v166
    %v206 = vunpack.c.l.b16 %v167
    %v207 = vunpack.c.l.b16 %v168
    %v208 = vunpack.c.l.b16 %v169
    %v209 = vunpack.c.l.b16 %v170
    %v210 = vpack.c.b16 %v195, %v194
    %v211 = vpack.c.b16 %v197, %v196
    %v212 = vpack.c.b16 %v199, %v198
    %v213 = vpack.c.b16 %v201, %v200
    %v214 = vpack.c.b16 %v203, %v202
    %v215 = vpack.c.b16 %v205, %v204
    %v216 = vpack.c.b16 %v207, %v206
    %v217 = vpack.c.b16 %v209, %v208
    %226 = vmatprep.subr.bf16.mxu0 0
    %227 = vmatpush1.bf16.msra.mxu0 %v210
    %228 = vmatprep.subr.bf16.mxu0 0
    %229 = vmatpush1.bf16.msra.mxu0 %v211
    %230 = vmatprep.subr.bf16.mxu0 0
    %231 = vmatpush1.bf16.msra.mxu0 %v212
    %232 = vmatprep.subr.bf16.mxu0 0
    %233 = vmatpush1.bf16.msra.mxu0 %v213
    %234 = vmatprep.subr.bf16.mxu0 0
    %235 = vmatpush1.bf16.msra.mxu0 %v214
    %236 = vmatprep.subr.bf16.mxu0 0
    %237 = vmatpush1.bf16.msra.mxu0 %v215
    %238 = vmatprep.subr.bf16.mxu0 0
    %239 = vmatpush1.bf16.msra.mxu0 %v216
    %240 = vmatprep.subr.bf16.mxu0 0
    %241 = vmatpush1.bf16.msra.mxu0 %v217
    %242 = vmatprep.subr.bf16.mxu0 0
    %243 = vmatpush1.bf16.msra.mxu0 0
    %244 = vmatprep.subr.bf16.mxu0 0
    %245 = vmatpush1.bf16.msra.mxu0 0
    %246 = vmatprep.subr.bf16.mxu0 0
    %247 = vmatpush1.bf16.msra.mxu0 0
    %248 = vmatprep.subr.bf16.mxu0 0
    %249 = vmatpush1.bf16.msra.mxu0 0
    %250 = vmatprep.subr.bf16.mxu0 0
    %251 = vmatpush1.bf16.msra.mxu0 0
    %252 = vmatprep.subr.bf16.mxu0 0
    %253 = vmatpush1.bf16.msra.mxu0 0
    %254 = vmatprep.subr.bf16.mxu0 0
    %255 = vmatpush1.bf16.msra.mxu0 0
    %256 = vmatprep.subr.bf16.mxu0 0
    %257 = vmatpush1.bf16.msra.mxu0 0
    %258 = vmatprep.mubr.bf16.mxu0 0
    %259 = vmatmul.mubr.bf16.gmra.mrb[0].mxu0 %v154
    %v260 = vpop.f32.mrb[0].mxu0
    %v261 = vadd.f32 %v176, %v260
    %v262 = vpop.f32.mrb[0].mxu0
    %v263 = vpop.f32.mrb[0].mxu0
    %v264 = vadd.f32 %v176, %v263
    %v265 = vpop.f32.mrb[0].mxu0
    %266 = vdwg.mxu0
    %v267 = vmax.f32 %v261, 0.0
    %v268 = vmax.f32 %v264, 0.0
    %v269 = vpack.c.bf16 %v268, %v267
    %v270 = vld [vmem:[%s4] sm:$0xf]
    %v271 = vld [vmem:[%s4 + $0x4] sm:$0xf]
    %v272 = vld [vmem:[%s4 + $0x8] sm:$0xf]
    %v273 = vld [vmem:[%s4 + $0xc] sm:$0xf]
    %v274 = vld [vmem:[%s4 + $0x10] sm:$0xf]
    %v275 = vld [vmem:[%s4 + $0x14] sm:$0xf]
    %v276 = vld [vmem:[%s4 + $0x18] sm:$0xf]
    %v277 = vld [vmem:[%s4 + $0x1c] sm:$0xf]
    %v278 = vld [vmem:[%s4 + $0x20] sm:$0xf]
    %v279 = vld [vmem:[%s4 + $0x24] sm:$0xf]
    %v280 = vld [vmem:[%s4 + $0x28] sm:$0xf]
    %v281 = vld [vmem:[%s4 + $0x2c] sm:$0xf]
    %v282 = vld [vmem:[%s4 + $0x30] sm:$0xf]
    %v283 = vld [vmem:[%s4 + $0x34] sm:$0xf]
    %v284 = vld [vmem:[%s4 + $0x38] sm:$0xf]
    %v285 = vld [vmem:[%s4 + $0x3c] sm:$0xf]
    %v286 = vld [vmem:[%s5] sm:$0x1]
    %v288 = vlaneseq
    %v289 = vshrl.u32 %v288, 7
    %v290 = vsub.s32 0, %v289
    %v291 = vrot.slane %v286, %v290
    %v309 = vunpack.c.l.b16 %v270
    %v310 = vunpack.c.l.b16 %v271
    %v311 = vunpack.c.l.b16 %v272
    %v312 = vunpack.c.l.b16 %v273
    %v313 = vunpack.c.l.b16 %v274
    %v314 = vunpack.c.l.b16 %v275
    %v315 = vunpack.c.l.b16 %v276
    %v316 = vunpack.c.l.b16 %v277
    %v317 = vunpack.c.l.b16 %v278
    %v318 = vunpack.c.l.b16 %v279
    %v319 = vunpack.c.l.b16 %v280
    %v320 = vunpack.c.l.b16 %v281
    %v321 = vunpack.c.l.b16 %v282
    %v322 = vunpack.c.l.b16 %v283
    %v323 = vunpack.c.l.b16 %v284
    %v324 = vunpack.c.l.b16 %v285
    %v325 = vpack.c.b16 %v310, %v309
    %v326 = vpack.c.b16 %v312, %v311
    %v327 = vpack.c.b16 %v314, %v313
    %v328 = vpack.c.b16 %v316, %v315
    %v329 = vpack.c.b16 %v318, %v317
    %v330 = vpack.c.b16 %v320, %v319
    %v331 = vpack.c.b16 %v322, %v321
    %v332 = vpack.c.b16 %v324, %v323
    %341 = vmatprep.subr.bf16.mxu0 0
    %342 = vmatpush1.bf16.msra.mxu0 %v325
    %343 = vmatprep.subr.bf16.mxu0 0
    %344 = vmatpush1.bf16.msra.mxu0 %v326
    %345 = vmatprep.subr.bf16.mxu0 0
    %346 = vmatpush1.bf16.msra.mxu0 %v327
    %347 = vmatprep.subr.bf16.mxu0 0
    %348 = vmatpush1.bf16.msra.mxu0 %v328
    %349 = vmatprep.subr.bf16.mxu0 0
    %350 = vmatpush1.bf16.msra.mxu0 %v329
    %351 = vmatprep.subr.bf16.mxu0 0
    %352 = vmatpush1.bf16.msra.mxu0 %v330
    %353 = vmatprep.subr.bf16.mxu0 0
    %354 = vmatpush1.bf16.msra.mxu0 %v331
    %355 = vmatprep.subr.bf16.mxu0 0
    %356 = vmatpush1.bf16.msra.mxu0 %v332
    %357 = vmatprep.subr.bf16.mxu0 0
    %358 = vmatpush1.bf16.msra.mxu0 0
    %359 = vmatprep.subr.bf16.mxu0 0
    %360 = vmatpush1.bf16.msra.mxu0 0
    %361 = vmatprep.subr.bf16.mxu0 0
    %362 = vmatpush1.bf16.msra.mxu0 0
    %363 = vmatprep.subr.bf16.mxu0 0
    %364 = vmatpush1.bf16.msra.mxu0 0
    %365 = vmatprep.subr.bf16.mxu0 0
    %366 = vmatpush1.bf16.msra.mxu0 0
    %367 = vmatprep.subr.bf16.mxu0 0
    %368 = vmatpush1.bf16.msra.mxu0 0
    %369 = vmatprep.subr.bf16.mxu0 0
    %370 = vmatpush1.bf16.msra.mxu0 0
    %371 = vmatprep.subr.bf16.mxu0 0
    %372 = vmatpush1.bf16.msra.mxu0 0
    %373 = vmatprep.mubr.bf16.mxu0 0
    %374 = vmatmul.mubr.bf16.gmra.mrb[0].mxu0 %v269
    %v375 = vpop.f32.mrb[0].mxu0
    %v376 = vadd.f32 %v291, %v375
    %v377 = vpop.f32.mrb[0].mxu0
    %v378 = vpop.f32.mrb[0].mxu0
    %v379 = vadd.f32 %v291, %v378
    %v380 = vpop.f32.mrb[0].mxu0
    %381 = vdwg.mxu0
    %v382 = vmax.f32 %v376, 0.0
    %v383 = vmax.f32 %v379, 0.0
    %384 = vst [vmem:[%s6] sm:$0xff] %v382
    %385 = vst [vmem:[%s6 + $0x8] sm:$0xff] %v383
  $region33: #{gcmc_forward.2} parent=0 // pred_fallthru
    _
  // Predicated region
  $region34: #{gcmc_forward.2} parent=0 // pred_check
    _
  $region35: #{gcmc_forward.2} parent=0 // pred_check_branch
    %387 = sbr.rel (0) target = $region37
  $region36: #{gcmc_forward.2} parent=0 // pred_region
    _
  $region37: #{gcmc_forward.2} parent=0 // pred_fallthru
    _
  // Predicated region
  $region38: #{gcmc_forward.2} parent=0 // pred_check
    _
  $region39: #{gcmc_forward.2} parent=0 // pred_check_branch
    %389 = sbr.rel (0) target = $region41
  $region40: #{gcmc_forward.2} parent=0 // pred_region
    _
  $region41: #{gcmc_forward.2} parent=0 // pred_fallthru
    _

</llo_original>
